<compile_context>
chip_gen: v7x
topology: tpu7x:2x2x1
jax: 0.10.0
libtpu: 0.0.40
codegen_flags: <defaults>
</compile_context>

<pallas_src>
import functools

import jax
import jax.numpy as jnp
from jax.experimental import pallas as pl
from jax.experimental.pallas import tpu as pltpu


# ---------------------------------------------------------------------------
# Kernel body: one batch tile through all three layers (bf16 MXU inputs,
# f32 accumulation; bias-add and ReLU in f32).
# ---------------------------------------------------------------------------
def ffn_kernel(x_ref, w1_ref, b1_ref, w2_ref, b2_ref, w3_ref, b3_ref, o_ref):
    x = x_ref[...]                                                    # (tb, in_p) bf16
    h1 = jnp.dot(x, w1_ref[...], preferred_element_type=jnp.float32)
    h1 = jnp.maximum(h1 + b1_ref[...], 0.0).astype(jnp.bfloat16)      # (tb, h_p)
    h2 = jnp.dot(h1, w2_ref[...], preferred_element_type=jnp.float32)
    h2 = jnp.maximum(h2 + b2_ref[...], 0.0).astype(jnp.bfloat16)      # (tb, h_p)
    out = jnp.dot(h2, w3_ref[...], preferred_element_type=jnp.float32) + b3_ref[...]
    o_ref[...] = out.astype(o_ref.dtype)                              # (tb, out_p)


# ---------------------------------------------------------------------------
# Small helpers
# ---------------------------------------------------------------------------
def _round_up(x, m):
    return ((x + m - 1) // m) * m


def _pad2(a, rows, cols, dtype):
    a = jnp.asarray(a).astype(dtype)
    return jnp.pad(a, ((0, rows - a.shape[0]), (0, cols - a.shape[1])))


@functools.lru_cache(maxsize=1)
def _device_kind():
    try:
        return jax.devices()[0].device_kind.lower()
    except Exception:
        return ""


@functools.lru_cache(maxsize=1)
def _tpu_vmem_capacity():
    """Physical VMEM bytes per core (generation-aware)."""
    try:
        return int(pltpu.get_tpu_info().vmem_capacity_bytes)
    except Exception:
        pass
    kind = _device_kind()
    if "v7" in kind:
        return 64 * 1024 * 1024
    if any(t in kind for t in ("v4", "v5", "v6")):
        return 128 * 1024 * 1024
    return 64 * 1024 * 1024  # unknown: conservative


@functools.lru_cache(maxsize=1)
def _k_alignment():
    # v6e/v7x MXUs are 256x256: align the matmul K dims to 256 so one K pass
    # fills the systolic array.  v5e's 128x128 MXU is already fed by 128.
    kind = _device_kind()
    if "v5 lite" in kind or "v5e" in kind or "v5litepod" in kind:
        return 128
    return 256


@functools.lru_cache(maxsize=1)
def _single_buffer_supported():
    """One-time, narrow feature probe for pipeline_mode=pl.Buffered(1)."""
    if not hasattr(pl, "Buffered"):
        return False

    def _probe(a_ref, o_ref):
        o_ref[...] = a_ref[...]

    try:
        fn = pl.pallas_call(
            _probe,
            out_shape=jax.ShapeDtypeStruct((8, 128), jnp.float32),
            grid_spec=pltpu.PrefetchScalarGridSpec(
                num_scalar_prefetch=0,
                grid=(1,),
                in_specs=[pl.BlockSpec((8, 128), lambda i: (0, 0),
                                       pipeline_mode=pl.Buffered(1))],
                out_specs=pl.BlockSpec((8, 128), lambda i: (0, 0)),
            ),
        )
        jax.jit(fn).lower(jax.ShapeDtypeStruct((8, 128), jnp.float32))
        return True
    except Exception:
        return False


def _resident_spec(shape):
    """Constant-index (fully resident) operand; single-buffered when supported."""
    if _single_buffer_supported():
        return pl.BlockSpec(shape, lambda i: (0, 0), pipeline_mode=pl.Buffered(1))
    return pl.BlockSpec(shape, lambda i: (0, 0))


def _choose_batch_tile(B, tile_b_max=512):
    """Pick batch tile (multiple of 16) limiting padding waste, prefer >=2 steps."""
    B16 = _round_up(B, 16)  # bf16 packs 16 rows per packed-vreg sublane group
    candidates = [c for c in (512, 256, 128, 64, 32, 16) if c <= max(tile_b_max, 16)]
    tb = 16
    for c in candidates:
        b_p = _round_up(B16, c)
        if (b_p - B) / b_p <= 0.15:   # keep batch-padding waste under ~15%
            tb = c
            break
    b_p = _round_up(B16, tb)
    # Give megacore / dual-TC chips >= 2 grid steps when it costs no extra padding.
    if b_p // tb < 2 and tb >= 32:
        half = _round_up(tb // 2, 16)
        if _round_up(B16, half) == b_p:
            tb = half
    return tb, _round_up(B16, tb)


def _vmem_request(tb, in_p, h_p, out_p):
    """Scoped-VMEM budget; raise clearly if resident weights cannot fit."""
    bytes_weights = 2 * (in_p * h_p + h_p * h_p + h_p * out_p)  # bf16, single-buffered
    bytes_biases = 4 * (2 * h_p + out_p)
    bytes_x = 2 * (2 * tb * in_p)        # bf16 x tile, double-buffered
    bytes_out = 2 * (4 * tb * out_p)     # f32 out tile, double-buffered
    bytes_acts = 2 * (4 * tb * h_p)      # live f32 h1/h2 intermediates
    need = bytes_weights + bytes_biases + bytes_x + bytes_out + bytes_acts
    cap = int(_tpu_vmem_capacity() * 0.80)  # ~102 MiB on 128-MiB chips, ~51 MiB on v7x
    if need > cap:
        # TODO(synk): hidden-dim-tiled reduction path (second grid axis marked
        # "arbitrary" + f32 accumulator scratch) for very large hidden_dim.
        raise NotImplementedError(
            f"Resident-weight FFN needs ~{need >> 20} MiB VMEM but only "
            f"~{cap >> 20} MiB is budgeted on this chip; hidden-dim tiling "
            f"is not implemented.")
    return int(min(max(2 * need, 16 * 1024 * 1024), cap))


def _build_call(b_p, tb, in_p, h_p, out_p, out_dtype, vmem_bytes):
    return pl.pallas_call(
        ffn_kernel,
        out_shape=jax.ShapeDtypeStruct((b_p, out_p), out_dtype),
        grid_spec=pltpu.PrefetchScalarGridSpec(
            num_scalar_prefetch=0,
            grid=(b_p // tb,),
            in_specs=[
                pl.BlockSpec((tb, in_p), lambda i: (i, 0)),   # streamed activation tile
                _resident_spec((in_p, h_p)),                  # w1
                _resident_spec((1, h_p)),                     # b1
                _resident_spec((h_p, h_p)),                   # w2
                _resident_spec((1, h_p)),                     # b2
                _resident_spec((h_p, out_p)),                 # w3
                _resident_spec((1, out_p)),                   # b3
            ],
            out_specs=pl.BlockSpec((tb, out_p), lambda i: (i, 0)),
        ),
        compiler_params=pltpu.CompilerParams(
            # "parallel" shards the batch grid axis across cores on megacore /
            # dual-TC chips; the tile chooser guarantees >= 2 steps when cheap.
            dimension_semantics=("parallel",),
            vmem_limit_bytes=vmem_bytes,
        ),
    )


@functools.partial(jax.jit,
                   static_argnames=("tb", "b_p", "in_p", "h_p", "out_p", "out_dim"))
def _ffn_forward(x, w1p, b1p, w2p, b2p, w3p, b3p, *,
                 tb, b_p, in_p, h_p, out_p, out_dim):
    B = x.shape[0]
    out_dtype = x.dtype
    xp = _pad2(x, b_p, in_p, jnp.bfloat16)   # only per-call padding left: activations
    vmem_bytes = _vmem_request(tb, in_p, h_p, out_p)
    call = _build_call(b_p, tb, in_p, h_p, out_p, out_dtype, vmem_bytes)
    out_padded = call(xp, w1p, b1p, w2p, b2p, w3p, b3p)
    return out_padded[:B, :out_dim]


class PallasTwoLayerFeedForward:
    """Linear->ReLU->Linear->ReLU->Linear with weights pre-padded/cast once."""

    def __init__(self, w1, b1, w2, b2, w3, b3, *, tile_b_max=512):
        self.in_dim = int(w1.shape[0])
        self.hidden_dim = int(w1.shape[1])
        self.out_dim = int(w3.shape[1])
        self.tile_b_max = int(tile_b_max)

        k_align = _k_alignment()
        self.in_p = _round_up(self.in_dim, k_align)     # K of layer 1
        self.h_p = _round_up(self.hidden_dim, k_align)  # N of 1/2, K of 2/3
        self.out_p = _round_up(self.out_dim, 128)       # lane-dense output

        _single_buffer_supported()  # warm the one-time feature probe (outside jit)

        # One-time pad + bf16/f32 cast (no per-call XLA pad/convert ops,
        # no per-call re-read of weight bytes outside the kernel's own DMA).
        self.w1p = _pad2(w1, self.in_p, self.h_p, jnp.bfloat16)
        self.w2p = _pad2(w2, self.h_p, self.h_p, jnp.bfloat16)
        self.w3p = _pad2(w3, self.h_p, self.out_p, jnp.bfloat16)
        self.b1p = _pad2(b1, 1, self.h_p, jnp.float32)
        self.b2p = _pad2(b2, 1, self.h_p, jnp.float32)
        self.b3p = _pad2(b3, 1, self.out_p, jnp.float32)

    def __call__(self, x):
        B = x.shape[0]
        tb, b_p = _choose_batch_tile(B, self.tile_b_max)
        return _ffn_forward(
            x, self.w1p, self.b1p, self.w2p, self.b2p, self.w3p, self.b3p,
            tb=tb, b_p=b_p, in_p=self.in_p, h_p=self.h_p,
            out_p=self.out_p, out_dim=self.out_dim)


def init_linear_params(key, fan_in, fan_out):
    """Deterministic init mimicking torch.nn.Linear: U(-1/sqrt(fan_in), 1/sqrt(fan_in))."""
    kw, kb = jax.random.split(key)
    bound = 1.0 / jnp.sqrt(float(fan_in))
    w = jax.random.uniform(kw, (fan_in, fan_out), jnp.float32, -bound, bound)
    b = jax.random.uniform(kb, (1, fan_out), jnp.float32, -bound, bound)
    return w, b


if __name__ == "__main__":
    in_dim, hidden_dim, out_dim = 2, 3, 2   # module defaults
    batch = 16

    key = jax.random.PRNGKey(0)
    kx, k1, k2, k3 = jax.random.split(key, 4)

    x = jax.random.normal(kx, (batch, in_dim), jnp.float32)
    w1, b1 = init_linear_params(k1, in_dim, hidden_dim)
    w2, b2 = init_linear_params(k2, hidden_dim, hidden_dim)
    w3, b3 = init_linear_params(k3, hidden_dim, out_dim)

    ffn = PallasTwoLayerFeedForward(w1, b1, w2, b2, w3, b3)
    out = jax.block_until_ready(ffn(x))

    # Pure-JAX f32 reference (same semantics as the torch nn.Sequential module).
    # Tolerance loosened because the kernel feeds the MXU bf16 inputs.
    h1 = jnp.maximum(x @ w1 + b1, 0.0)
    h2 = jnp.maximum(h1 @ w2 + b2, 0.0)
    ref = h2 @ w3 + b3
    assert out.shape == ref.shape, "shape mismatch vs reference"
    assert jnp.allclose(out, ref, atol=2e-2, rtol=2e-2), "mismatch vs reference"

    print("KERNEL_OK")
</pallas_src>

<mosaic_0001>
module attributes {stable_mosaic.version = 11 : i64} {
  func.func @ffn_kernel(%arg0: i32, %arg1: memref<16x256xbf16, #tpu.memory_space<vmem>>, %arg2: memref<256x256xbf16, #tpu.memory_space<vmem>>, %arg3: memref<1x256xf32, #tpu.memory_space<vmem>>, %arg4: memref<256x256xbf16, #tpu.memory_space<vmem>>, %arg5: memref<1x256xf32, #tpu.memory_space<vmem>>, %arg6: memref<256x128xbf16, #tpu.memory_space<vmem>>, %arg7: memref<1x128xf32, #tpu.memory_space<vmem>>, %arg8: memref<16x128xf32, #tpu.memory_space<vmem>>) attributes {dimension_semantics = [#tpu.dimension_semantics<parallel>], iteration_bounds = array<i64: 1>, scalar_prefetch = 0 : i64, scratch_operands = 0 : i64, tpu.core_type = #tpu.core_type<tc>, window_params = [{transform_indices = @transform_0, window_bounds = array<i64: 16, 256>}, {pipeline_mode = #tpu.pipeline_mode<synchronous>, transform_indices = @transform_1, window_bounds = array<i64: 256, 256>}, {pipeline_mode = #tpu.pipeline_mode<synchronous>, transform_indices = @transform_2, window_bounds = array<i64: 1, 256>}, {pipeline_mode = #tpu.pipeline_mode<synchronous>, transform_indices = @transform_3, window_bounds = array<i64: 256, 256>}, {pipeline_mode = #tpu.pipeline_mode<synchronous>, transform_indices = @transform_4, window_bounds = array<i64: 1, 256>}, {pipeline_mode = #tpu.pipeline_mode<synchronous>, transform_indices = @transform_5, window_bounds = array<i64: 256, 128>}, {pipeline_mode = #tpu.pipeline_mode<synchronous>, transform_indices = @transform_6, window_bounds = array<i64: 1, 128>}, {transform_indices = @transform_7, window_bounds = array<i64: 16, 128>}]} {
    %c0 = arith.constant 0 : index
    %c0_0 = arith.constant 0 : index
    %0 = vector.load %arg1[%c0, %c0_0] : memref<16x256xbf16, #tpu.memory_space<vmem>>, vector<16x256xbf16>
    %c0_1 = arith.constant 0 : index
    %c0_2 = arith.constant 0 : index
    %1 = vector.load %arg2[%c0_1, %c0_2] : memref<256x256xbf16, #tpu.memory_space<vmem>>, vector<256x256xbf16>
    %cst = arith.constant dense<0.000000e+00> : vector<16x256xf32>
    %2 = tpu.matmul %0, %1, %cst {dimension_numbers = #tpu.dot_dimension_numbers<[1], [0], [0], [1], [0, 0, 1, 1], [], []>} : vector<16x256xbf16>, vector<256x256xbf16>, vector<16x256xf32> -> vector<16x256xf32>
    %c0_3 = arith.constant 0 : index
    %c0_4 = arith.constant 0 : index
    %3 = vector.load %arg3[%c0_3, %c0_4] : memref<1x256xf32, #tpu.memory_space<vmem>>, vector<1x256xf32>
    %4 = vector.broadcast %3 : vector<1x256xf32> to vector<16x256xf32>
    %5 = arith.addf %2, %4 : vector<16x256xf32>
    %cst_5 = arith.constant 0.000000e+00 : f32
    %6 = vector.broadcast %cst_5 : f32 to vector<16x256xf32>
    %7 = arith.maximumf %5, %6 : vector<16x256xf32>
    %8 = arith.truncf %7 : vector<16x256xf32> to vector<16x256xbf16>
    %c0_6 = arith.constant 0 : index
    %c0_7 = arith.constant 0 : index
    %9 = vector.load %arg4[%c0_6, %c0_7] : memref<256x256xbf16, #tpu.memory_space<vmem>>, vector<256x256xbf16>
    %cst_8 = arith.constant dense<0.000000e+00> : vector<16x256xf32>
    %10 = tpu.matmul %8, %9, %cst_8 {dimension_numbers = #tpu.dot_dimension_numbers<[1], [0], [0], [1], [0, 0, 1, 1], [], []>} : vector<16x256xbf16>, vector<256x256xbf16>, vector<16x256xf32> -> vector<16x256xf32>
    %c0_9 = arith.constant 0 : index
    %c0_10 = arith.constant 0 : index
    %11 = vector.load %arg5[%c0_9, %c0_10] : memref<1x256xf32, #tpu.memory_space<vmem>>, vector<1x256xf32>
    %12 = vector.broadcast %11 : vector<1x256xf32> to vector<16x256xf32>
    %13 = arith.addf %10, %12 : vector<16x256xf32>
    %cst_11 = arith.constant 0.000000e+00 : f32
    %14 = vector.broadcast %cst_11 : f32 to vector<16x256xf32>
    %15 = arith.maximumf %13, %14 : vector<16x256xf32>
    %16 = arith.truncf %15 : vector<16x256xf32> to vector<16x256xbf16>
    %c0_12 = arith.constant 0 : index
    %c0_13 = arith.constant 0 : index
    %17 = vector.load %arg6[%c0_12, %c0_13] : memref<256x128xbf16, #tpu.memory_space<vmem>>, vector<256x128xbf16>
    %cst_14 = arith.constant dense<0.000000e+00> : vector<16x128xf32>
    %18 = tpu.matmul %16, %17, %cst_14 {dimension_numbers = #tpu.dot_dimension_numbers<[1], [0], [0], [1], [0, 0, 1, 1], [], []>} : vector<16x256xbf16>, vector<256x128xbf16>, vector<16x128xf32> -> vector<16x128xf32>
    %c0_15 = arith.constant 0 : index
    %c0_16 = arith.constant 0 : index
    %19 = vector.load %arg7[%c0_15, %c0_16] : memref<1x128xf32, #tpu.memory_space<vmem>>, vector<1x128xf32>
    %20 = vector.broadcast %19 : vector<1x128xf32> to vector<16x128xf32>
    %21 = arith.addf %18, %20 : vector<16x128xf32>
    %c0_17 = arith.constant 0 : index
    %c0_18 = arith.constant 0 : index
    %22 = vector.load %arg8[%c0_17, %c0_18] : memref<16x128xf32, #tpu.memory_space<vmem>>, vector<16x128xf32>
    tpu.vector_store %arg8[%c0_17, %c0_18], %21 {strides = array<i32>} : memref<16x128xf32, #tpu.memory_space<vmem>>, vector<16x128xf32>,
    return
  }
  func.func @transform_0(%arg0: i32) -> (i32, i32) {
    %c0_i32 = arith.constant 0 : i32
    %c0_i32_0 = arith.constant 0 : i32
    return %arg0, %c0_i32 : i32, i32
  }
  func.func @transform_1(%arg0: i32) -> (i32, i32) {
    %c0_i32 = arith.constant 0 : i32
    %c0_i32_0 = arith.constant 0 : i32
    %c0_i32_1 = arith.constant 0 : i32
    return %c0_i32, %c0_i32_0 : i32, i32
  }
  func.func @transform_2(%arg0: i32) -> (i32, i32) {
    %c0_i32 = arith.constant 0 : i32
    %c0_i32_0 = arith.constant 0 : i32
    %c0_i32_1 = arith.constant 0 : i32
    return %c0_i32, %c0_i32_0 : i32, i32
  }
  func.func @transform_3(%arg0: i32) -> (i32, i32) {
    %c0_i32 = arith.constant 0 : i32
    %c0_i32_0 = arith.constant 0 : i32
    %c0_i32_1 = arith.constant 0 : i32
    return %c0_i32, %c0_i32_0 : i32, i32
  }
  func.func @transform_4(%arg0: i32) -> (i32, i32) {
    %c0_i32 = arith.constant 0 : i32
    %c0_i32_0 = arith.constant 0 : i32
    %c0_i32_1 = arith.constant 0 : i32
    return %c0_i32, %c0_i32_0 : i32, i32
  }
  func.func @transform_5(%arg0: i32) -> (i32, i32) {
    %c0_i32 = arith.constant 0 : i32
    %c0_i32_0 = arith.constant 0 : i32
    %c0_i32_1 = arith.constant 0 : i32
    return %c0_i32, %c0_i32_0 : i32, i32
  }
  func.func @transform_6(%arg0: i32) -> (i32, i32) {
    %c0_i32 = arith.constant 0 : i32
    %c0_i32_0 = arith.constant 0 : i32
    %c0_i32_1 = arith.constant 0 : i32
    return %c0_i32, %c0_i32_0 : i32, i32
  }
  func.func @transform_7(%arg0: i32) -> (i32, i32) {
    %c0_i32 = arith.constant 0 : i32
    %c0_i32_0 = arith.constant 0 : i32
    return %arg0, %c0_i32 : i32, i32
  }
}

</mosaic_0001>

<llo_original>
// kernel: _ffn_forward.1
$region0: #{_ffn_forward.1}
  #allocation0 [shape = 'u32[]', space=smem, size = 0x4, offset = 0x4, fixed_abs, tag = 'smem constant byte address 0x4 - core index']
  #allocation1 [shape = 'u32[144,128]{1,0:T(1,128)}', space=vmem, size = 0x12000, scoped, tag = 'internal scratch']
  %s0 = inlined_call_operand.vmem [shape: bf16[16,256], index: 0, kind: input, shape index: {}]
  %s1 = inlined_call_operand.hbm [shape: bf16[256,256], index: 1, kind: input, shape index: {}]
  %s2 = inlined_call_operand.vmem [shape: f32[1,256], index: 2, kind: input, shape index: {}]
  %s3 = inlined_call_operand.hbm [shape: bf16[256,256], index: 3, kind: input, shape index: {}]
  %s4 = inlined_call_operand.vmem [shape: f32[1,256], index: 4, kind: input, shape index: {}]
  %s5 = inlined_call_operand.hbm [shape: bf16[256,128], index: 5, kind: input, shape index: {}]
  %s6 = inlined_call_operand.vmem [shape: f32[1,128], index: 6, kind: input, shape index: {}]
  %s7 = inlined_call_operand.vmem [shape: f32[16,128], index: 7, kind: output, shape index: {}]
  %s8 = sld [smem:[#allocation0]]
  $region50: #{_ffn_forward.1} parent=0
    _
  %s10 = ssub.s32 1, %s8
  %s11 = scalar_select 0, %s10, %s8
  $region1: #{_ffn_forward.1} parent=0
    #allocation2 [shape = 'u8[131072]{0}', space=vmem, size = 0x20000, scoped, tag = 'input window, operand 1, single buffered']
    #allocation3 [shape = 's32[1]{0}', space=sflag, size = 0x4, scoped, tag = 'scoped memory for _ffn_forward.1']
    #allocation4 [shape = 'u8[131072]{0}', space=vmem, size = 0x20000, scoped, tag = 'input window, operand 3, single buffered']
    #allocation5 [shape = 's32[1]{0}', space=sflag, size = 0x4, scoped, tag = 'scoped memory for _ffn_forward.1']
    #allocation6 [shape = 'u8[65536]{0}', space=vmem, size = 0x10000, scoped, tag = 'input window, operand 5, single buffered']
    %12 = vsyncpa [#allocation3], 0
    %13 = vsyncpa [#allocation5], 0
    // Predicated region
    $region2: #{_ffn_forward.1} parent=1 // pred_check
      _
    $region3: #{_ffn_forward.1} parent=1 // pred_check_branch
      %15 = sbr.rel (0) target = $region5
    $region4: #{_ffn_forward.1} parent=1 // pred_region
      _
    $region5: #{_ffn_forward.1} parent=1 // pred_fallthru
      _
    // Predicated region
    $region6: #{_ffn_forward.1} parent=1 // pred_check
      _
    $region7: #{_ffn_forward.1} parent=1 // pred_check_branch
      %17 = sbr.rel (0) target = $region9
    $region8: #{_ffn_forward.1} parent=1 // pred_region
      %s19 = ssub.s32 4096, 4096
      %20 = vsyncadd [#allocation3], %s19
      %s21 = sshll.u32 [#allocation2], 4
      %s22 = int_to_ptr.vmem [resolvable:$true] %s21
      %27 = dma.hbm_to_vmem [thread:$0]  %s1, 4096, %s22, [#allocation3], 128, 128, 8
    $region9: #{_ffn_forward.1} parent=1 // pred_fallthru
      _
    // Predicated region
    $region10: #{_ffn_forward.1} parent=1 // pred_check
      _
    $region11: #{_ffn_forward.1} parent=1 // pred_check_branch
      %29 = sbr.rel (0) target = $region13
    $region12: #{_ffn_forward.1} parent=1 // pred_region
      _
    $region13: #{_ffn_forward.1} parent=1 // pred_fallthru
      _
    // Predicated region
    $region14: #{_ffn_forward.1} parent=1 // pred_check
      _
    $region15: #{_ffn_forward.1} parent=1 // pred_check_branch
      %31 = sbr.rel (0) target = $region17
    $region16: #{_ffn_forward.1} parent=1 // pred_region
      %s33 = ssub.s32 4096, 4096
      %34 = vsyncadd [#allocation5], %s33
      %s35 = sshll.u32 [#allocation4], 4
      %s36 = int_to_ptr.vmem [resolvable:$true] %s35
      %41 = dma.hbm_to_vmem [thread:$0]  %s3, 4096, %s36, [#allocation5], 128, 128, 8
    $region17: #{_ffn_forward.1} parent=1 // pred_fallthru
      _
    // Predicated region
    $region18: #{_ffn_forward.1} parent=1 // pred_check
      _
    $region19: #{_ffn_forward.1} parent=1 // pred_check_branch
      %43 = sbr.rel (0) target = $region21
    $region20: #{_ffn_forward.1} parent=1 // pred_region
      _
    $region21: #{_ffn_forward.1} parent=1 // pred_fallthru
      _
    // Predicated region
    $region22: #{_ffn_forward.1} parent=1 // pred_check
      _
    $region23: #{_ffn_forward.1} parent=1 // pred_check_branch
      %45 = sbr.rel (0) target = $region25
    $region24: #{_ffn_forward.1} parent=1 // pred_region
      %s47 = ssub.s32 2048, 2048
      %48 = vsyncadd [#allocation5], %s47
      %s49 = sshll.u32 [#allocation6], 4
      %s50 = int_to_ptr.vmem [resolvable:$true] %s49
      %55 = dma.hbm_to_vmem [thread:$0]  %s5, 2048, %s50, [#allocation5], 64, 64, 4
    $region25: #{_ffn_forward.1} parent=1 // pred_fallthru
      _
    // Predicated region
    $region26: #{_ffn_forward.1} parent=1 // pred_check
      _
    $region27: #{_ffn_forward.1} parent=1 // pred_check_branch
      %57 = sbr.rel (0) target = $region29
    $region28: #{_ffn_forward.1} parent=1 // pred_region
      _
    $region29: #{_ffn_forward.1} parent=1 // pred_fallthru
      _
    // Predicated region
    $region30: #{_ffn_forward.1} parent=1 // pred_check
      _
    $region31: #{_ffn_forward.1} parent=1 // pred_check_branch
      %59 = sbr.rel (0) target = $region33
    $region32: #{_ffn_forward.1} parent=1 // pred_region
      %60 = dma.done [#allocation3], 4096
    $region33: #{_ffn_forward.1} parent=1 // pred_fallthru
      _
    // Predicated region
    $region34: #{_ffn_forward.1} parent=1 // pred_check
      _
    $region35: #{_ffn_forward.1} parent=1 // pred_check_branch
      %62 = sbr.rel (0) target = $region37
    $region36: #{_ffn_forward.1} parent=1 // pred_region
      %63 = dma.done [#allocation5], 4096
    $region37: #{_ffn_forward.1} parent=1 // pred_fallthru
      _
    // Predicated region
    $region38: #{_ffn_forward.1} parent=1 // pred_check
      _
    $region39: #{_ffn_forward.1} parent=1 // pred_check_branch
      %65 = sbr.rel (0) target = $region41
    $region40: #{_ffn_forward.1} parent=1 // pred_region
      %66 = dma.done [#allocation5], 2048
    $region41: #{_ffn_forward.1} parent=1 // pred_fallthru
      _
    %v68 = vld [vmem:[%s0] sm:$0xff]
    %v69 = vld [vmem:[%s0 + $0x8] sm:$0xff]
    %v70 = vld [vmem:[#allocation2] sm:$0xff]
    %v71 = vld [vmem:[#allocation2 + $0x8] sm:$0xff]
    %v72 = vld [vmem:[#allocation2 + $0x10] sm:$0xff]
    %v73 = vld [vmem:[#allocation2 + $0x18] sm:$0xff]
    %v74 = vld [vmem:[#allocation2 + $0x20] sm:$0xff]
    %v75 = vld [vmem:[#allocation2 + $0x28] sm:$0xff]
    %v76 = vld [vmem:[#allocation2 + $0x30] sm:$0xff]
    %v77 = vld [vmem:[#allocation2 + $0x38] sm:$0xff]
    %v78 = vld [vmem:[#allocation2 + $0x40] sm:$0xff]
    %v79 = vld [vmem:[#allocation2 + $0x48] sm:$0xff]
    %v80 = vld [vmem:[#allocation2 + $0x50] sm:$0xff]
    %v81 = vld [vmem:[#allocation2 + $0x58] sm:$0xff]
    %v82 = vld [vmem:[#allocation2 + $0x60] sm:$0xff]
    %v83 = vld [vmem:[#allocation2 + $0x68] sm:$0xff]
    %v84 = vld [vmem:[#allocation2 + $0x70] sm:$0xff]
    %v85 = vld [vmem:[#allocation2 + $0x78] sm:$0xff]
    %v86 = vld [vmem:[#allocation2 + $0x80] sm:$0xff]
    %v87 = vld [vmem:[#allocation2 + $0x88] sm:$0xff]
    %v88 = vld [vmem:[#allocation2 + $0x90] sm:$0xff]
    %v89 = vld [vmem:[#allocation2 + $0x98] sm:$0xff]
    %v90 = vld [vmem:[#allocation2 + $0xa0] sm:$0xff]
    %v91 = vld [vmem:[#allocation2 + $0xa8] sm:$0xff]
    %v92 = vld [vmem:[#allocation2 + $0xb0] sm:$0xff]
    %v93 = vld [vmem:[#allocation2 + $0xb8] sm:$0xff]
    %v94 = vld [vmem:[#allocation2 + $0xc0] sm:$0xff]
    %v95 = vld [vmem:[#allocation2 + $0xc8] sm:$0xff]
    %v96 = vld [vmem:[#allocation2 + $0xd0] sm:$0xff]
    %v97 = vld [vmem:[#allocation2 + $0xd8] sm:$0xff]
    %v98 = vld [vmem:[#allocation2 + $0xe0] sm:$0xff]
    %v99 = vld [vmem:[#allocation2 + $0xe8] sm:$0xff]
    %v100 = vld [vmem:[#allocation2 + $0xf0] sm:$0xff]
    %v101 = vld [vmem:[#allocation2 + $0xf8] sm:$0xff]
    %v102 = vld [vmem:[%s2] sm:$0x3]
    %v104 = vlaneseq
    %v105 = vshrl.u32 %v104, 7
    %v106 = vsub.s32 0, %v105
    %v107 = vrot.slane %v102, %v106
    %v108 = vlaneseq
    %v109 = vshrl.u32 %v108, 7
    %v110 = vsub.s32 1, %v109
    %v111 = vrot.slane %v102, %v110
    %v116 = vunpack.c.l.b16 %v68
    %v117 = vunpack.c.h.b16 %v68
    %v118 = vunpack.c.l.b16 %v69
    %v119 = vunpack.c.h.b16 %v69
    %v120 = vpack.c.b16 %v118, %v116
    %v121 = vpack.c.b16 %v119, %v117
    %v156 = vunpack.c.l.b16 %v70
    %v157 = vunpack.c.h.b16 %v70
    %v158 = vunpack.c.l.b16 %v71
    %v159 = vunpack.c.h.b16 %v71
    %v160 = vunpack.c.l.b16 %v72
    %v161 = vunpack.c.h.b16 %v72
    %v162 = vunpack.c.l.b16 %v73
    %v163 = vunpack.c.h.b16 %v73
    %v164 = vunpack.c.l.b16 %v74
    %v165 = vunpack.c.h.b16 %v74
    %v166 = vunpack.c.l.b16 %v75
    %v167 = vunpack.c.h.b16 %v75
    %v168 = vunpack.c.l.b16 %v76
    %v169 = vunpack.c.h.b16 %v76
    %v170 = vunpack.c.l.b16 %v77
    %v171 = vunpack.c.h.b16 %v77
    %v172 = vunpack.c.l.b16 %v78
    %v173 = vunpack.c.h.b16 %v78
    %v174 = vunpack.c.l.b16 %v79
    %v175 = vunpack.c.h.b16 %v79
    %v176 = vunpack.c.l.b16 %v80
    %v177 = vunpack.c.h.b16 %v80
    %v178 = vunpack.c.l.b16 %v81
    %v179 = vunpack.c.h.b16 %v81
    %v180 = vunpack.c.l.b16 %v82
    %v181 = vunpack.c.h.b16 %v82
    %v182 = vunpack.c.l.b16 %v83
    %v183 = vunpack.c.h.b16 %v83
    %v184 = vunpack.c.l.b16 %v84
    %v185 = vunpack.c.h.b16 %v84
    %v186 = vunpack.c.l.b16 %v85
    %v187 = vunpack.c.h.b16 %v85
    %v188 = vunpack.c.l.b16 %v86
    %v189 = vunpack.c.h.b16 %v86
    %v190 = vunpack.c.l.b16 %v87
    %v191 = vunpack.c.h.b16 %v87
    %v192 = vunpack.c.l.b16 %v88
    %v193 = vunpack.c.h.b16 %v88
    %v194 = vunpack.c.l.b16 %v89
    %v195 = vunpack.c.h.b16 %v89
    %v196 = vunpack.c.l.b16 %v90
    %v197 = vunpack.c.h.b16 %v90
    %v198 = vunpack.c.l.b16 %v91
    %v199 = vunpack.c.h.b16 %v91
    %v200 = vunpack.c.l.b16 %v92
    %v201 = vunpack.c.h.b16 %v92
    %v202 = vunpack.c.l.b16 %v93
    %v203 = vunpack.c.h.b16 %v93
    %v204 = vunpack.c.l.b16 %v94
    %v205 = vunpack.c.h.b16 %v94
    %v206 = vunpack.c.l.b16 %v95
    %v207 = vunpack.c.h.b16 %v95
    %v208 = vunpack.c.l.b16 %v96
    %v209 = vunpack.c.h.b16 %v96
    %v210 = vunpack.c.l.b16 %v97
    %v211 = vunpack.c.h.b16 %v97
    %v212 = vunpack.c.l.b16 %v98
    %v213 = vunpack.c.h.b16 %v98
    %v214 = vunpack.c.l.b16 %v99
    %v215 = vunpack.c.h.b16 %v99
    %v216 = vunpack.c.l.b16 %v100
    %v217 = vunpack.c.h.b16 %v100
    %v218 = vunpack.c.l.b16 %v101
    %v219 = vunpack.c.h.b16 %v101
    %v220 = vpack.c.b16 %v158, %v156
    %v221 = vpack.c.b16 %v159, %v157
    %v222 = vpack.c.b16 %v162, %v160
    %v223 = vpack.c.b16 %v163, %v161
    %v224 = vpack.c.b16 %v166, %v164
    %v225 = vpack.c.b16 %v167, %v165
    %v226 = vpack.c.b16 %v170, %v168
    %v227 = vpack.c.b16 %v171, %v169
    %v228 = vpack.c.b16 %v174, %v172
    %v229 = vpack.c.b16 %v175, %v173
    %v230 = vpack.c.b16 %v178, %v176
    %v231 = vpack.c.b16 %v179, %v177
    %v232 = vpack.c.b16 %v182, %v180
    %v233 = vpack.c.b16 %v183, %v181
    %v234 = vpack.c.b16 %v186, %v184
    %v235 = vpack.c.b16 %v187, %v185
    %v236 = vpack.c.b16 %v190, %v188
    %v237 = vpack.c.b16 %v191, %v189
    %v238 = vpack.c.b16 %v194, %v192
    %v239 = vpack.c.b16 %v195, %v193
    %v240 = vpack.c.b16 %v198, %v196
    %v241 = vpack.c.b16 %v199, %v197
    %v242 = vpack.c.b16 %v202, %v200
    %v243 = vpack.c.b16 %v203, %v201
    %v244 = vpack.c.b16 %v206, %v204
    %v245 = vpack.c.b16 %v207, %v205
    %v246 = vpack.c.b16 %v210, %v208
    %v247 = vpack.c.b16 %v211, %v209
    %v248 = vpack.c.b16 %v214, %v212
    %v249 = vpack.c.b16 %v215, %v213
    %v250 = vpack.c.b16 %v218, %v216
    %v251 = vpack.c.b16 %v219, %v217
    %284 = vmatprep.subr.bf16.mxu0 %v221
    %285 = vmatpush1.bf16.msra.mxu0 %v220
    %286 = vmatprep.subr.bf16.mxu0 %v223
    %287 = vmatpush1.bf16.msra.mxu0 %v222
    %288 = vmatprep.subr.bf16.mxu0 %v225
    %289 = vmatpush1.bf16.msra.mxu0 %v224
    %290 = vmatprep.subr.bf16.mxu0 %v227
    %291 = vmatpush1.bf16.msra.mxu0 %v226
    %292 = vmatprep.subr.bf16.mxu0 %v229
    %293 = vmatpush1.bf16.msra.mxu0 %v228
    %294 = vmatprep.subr.bf16.mxu0 %v231
    %295 = vmatpush1.bf16.msra.mxu0 %v230
    %296 = vmatprep.subr.bf16.mxu0 %v233
    %297 = vmatpush1.bf16.msra.mxu0 %v232
    %298 = vmatprep.subr.bf16.mxu0 %v235
    %299 = vmatpush1.bf16.msra.mxu0 %v234
    %300 = vmatprep.subr.bf16.mxu0 %v237
    %301 = vmatpush1.bf16.msra.mxu0 %v236
    %302 = vmatprep.subr.bf16.mxu0 %v239
    %303 = vmatpush1.bf16.msra.mxu0 %v238
    %304 = vmatprep.subr.bf16.mxu0 %v241
    %305 = vmatpush1.bf16.msra.mxu0 %v240
    %306 = vmatprep.subr.bf16.mxu0 %v243
    %307 = vmatpush1.bf16.msra.mxu0 %v242
    %308 = vmatprep.subr.bf16.mxu0 %v245
    %309 = vmatpush1.bf16.msra.mxu0 %v244
    %310 = vmatprep.subr.bf16.mxu0 %v247
    %311 = vmatpush1.bf16.msra.mxu0 %v246
    %312 = vmatprep.subr.bf16.mxu0 %v249
    %313 = vmatpush1.bf16.msra.mxu0 %v248
    %314 = vmatprep.subr.bf16.mxu0 %v251
    %315 = vmatpush1.bf16.msra.mxu0 %v250
    %316 = vmatprep.mubr.bf16.mxu0 %v121
    %317 = vmatmul.mubr.bf16.gmra.mrb[0].mxu0 %v120
    %v318 = vpop.f32.mrb[0].mxu0
    %v319 = vadd.f32 %v107, %v318
    %v320 = vpop.f32.mrb[0].mxu0
    %v321 = vadd.f32 %v111, %v320
    %v322 = vpop.f32.mrb[0].mxu0
    %v323 = vadd.f32 %v107, %v322
    %v324 = vpop.f32.mrb[0].mxu0
    %v325 = vadd.f32 %v111, %v324
    %326 = vdwg.mxu0
    %v327 = vmax.f32 %v319, 0.0
    %v328 = vmax.f32 %v321, 0.0
    %v329 = vmax.f32 %v323, 0.0
    %v330 = vmax.f32 %v325, 0.0
    %v331 = vpack.c.bf16 %v329, %v327
    %v332 = vpack.c.bf16 %v330, %v328
    %v333 = vld [vmem:[#allocation4] sm:$0xff]
    %v334 = vld [vmem:[#allocation4 + $0x8] sm:$0xff]
    %v335 = vld [vmem:[#allocation4 + $0x10] sm:$0xff]
    %v336 = vld [vmem:[#allocation4 + $0x18] sm:$0xff]
    %v337 = vld [vmem:[#allocation4 + $0x20] sm:$0xff]
    %v338 = vld [vmem:[#allocation4 + $0x28] sm:$0xff]
    %v339 = vld [vmem:[#allocation4 + $0x30] sm:$0xff]
    %v340 = vld [vmem:[#allocation4 + $0x38] sm:$0xff]
    %v341 = vld [vmem:[#allocation4 + $0x40] sm:$0xff]
    %v342 = vld [vmem:[#allocation4 + $0x48] sm:$0xff]
    %v343 = vld [vmem:[#allocation4 + $0x50] sm:$0xff]
    %v344 = vld [vmem:[#allocation4 + $0x58] sm:$0xff]
    %v345 = vld [vmem:[#allocation4 + $0x60] sm:$0xff]
    %v346 = vld [vmem:[#allocation4 + $0x68] sm:$0xff]
    %v347 = vld [vmem:[#allocation4 + $0x70] sm:$0xff]
    %v348 = vld [vmem:[#allocation4 + $0x78] sm:$0xff]
    %v349 = vld [vmem:[#allocation4 + $0x80] sm:$0xff]
    %v350 = vld [vmem:[#allocation4 + $0x88] sm:$0xff]
    %v351 = vld [vmem:[#allocation4 + $0x90] sm:$0xff]
    %v352 = vld [vmem:[#allocation4 + $0x98] sm:$0xff]
    %v353 = vld [vmem:[#allocation4 + $0xa0] sm:$0xff]
    %v354 = vld [vmem:[#allocation4 + $0xa8] sm:$0xff]
    %v355 = vld [vmem:[#allocation4 + $0xb0] sm:$0xff]
    %v356 = vld [vmem:[#allocation4 + $0xb8] sm:$0xff]
    %v357 = vld [vmem:[#allocation4 + $0xc0] sm:$0xff]
    %v358 = vld [vmem:[#allocation4 + $0xc8] sm:$0xff]
    %v359 = vld [vmem:[#allocation4 + $0xd0] sm:$0xff]
    %v360 = vld [vmem:[#allocation4 + $0xd8] sm:$0xff]
    %v361 = vld [vmem:[#allocation4 + $0xe0] sm:$0xff]
    %v362 = vld [vmem:[#allocation4 + $0xe8] sm:$0xff]
    %v363 = vld [vmem:[#allocation4 + $0xf0] sm:$0xff]
    %v364 = vld [vmem:[#allocation4 + $0xf8] sm:$0xff]
    %v365 = vld [vmem:[%s4] sm:$0x3]
    %v367 = vlaneseq
    %v368 = vshrl.u32 %v367, 7
    %v369 = vsub.s32 0, %v368
    %v370 = vrot.slane %v365, %v369
    %v371 = vlaneseq
    %v372 = vshrl.u32 %v371, 7
    %v373 = vsub.s32 1, %v372
    %v374 = vrot.slane %v365, %v373
    %v409 = vunpack.c.l.b16 %v333
    %v410 = vunpack.c.h.b16 %v333
    %v411 = vunpack.c.l.b16 %v334
    %v412 = vunpack.c.h.b16 %v334
    %v413 = vunpack.c.l.b16 %v335
    %v414 = vunpack.c.h.b16 %v335
    %v415 = vunpack.c.l.b16 %v336
    %v416 = vunpack.c.h.b16 %v336
    %v417 = vunpack.c.l.b16 %v337
    %v418 = vunpack.c.h.b16 %v337
    %v419 = vunpack.c.l.b16 %v338
    %v420 = vunpack.c.h.b16 %v338
    %v421 = vunpack.c.l.b16 %v339
    %v422 = vunpack.c.h.b16 %v339
    %v423 = vunpack.c.l.b16 %v340
    %v424 = vunpack.c.h.b16 %v340
    %v425 = vunpack.c.l.b16 %v341
    %v426 = vunpack.c.h.b16 %v341
    %v427 = vunpack.c.l.b16 %v342
    %v428 = vunpack.c.h.b16 %v342
    %v429 = vunpack.c.l.b16 %v343
    %v430 = vunpack.c.h.b16 %v343
    %v431 = vunpack.c.l.b16 %v344
    %v432 = vunpack.c.h.b16 %v344
    %v433 = vunpack.c.l.b16 %v345
    %v434 = vunpack.c.h.b16 %v345
    %v435 = vunpack.c.l.b16 %v346
    %v436 = vunpack.c.h.b16 %v346
    %v437 = vunpack.c.l.b16 %v347
    %v438 = vunpack.c.h.b16 %v347
    %v439 = vunpack.c.l.b16 %v348
    %v440 = vunpack.c.h.b16 %v348
    %v441 = vunpack.c.l.b16 %v349
    %v442 = vunpack.c.h.b16 %v349
    %v443 = vunpack.c.l.b16 %v350
    %v444 = vunpack.c.h.b16 %v350
    %v445 = vunpack.c.l.b16 %v351
    %v446 = vunpack.c.h.b16 %v351
    %v447 = vunpack.c.l.b16 %v352
    %v448 = vunpack.c.h.b16 %v352
    %v449 = vunpack.c.l.b16 %v353
    %v450 = vunpack.c.h.b16 %v353
    %v451 = vunpack.c.l.b16 %v354
    %v452 = vunpack.c.h.b16 %v354
    %v453 = vunpack.c.l.b16 %v355
    %v454 = vunpack.c.h.b16 %v355
    %v455 = vunpack.c.l.b16 %v356
    %v456 = vunpack.c.h.b16 %v356
    %v457 = vunpack.c.l.b16 %v357
    %v458 = vunpack.c.h.b16 %v357
    %v459 = vunpack.c.l.b16 %v358
    %v460 = vunpack.c.h.b16 %v358
    %v461 = vunpack.c.l.b16 %v359
    %v462 = vunpack.c.h.b16 %v359
    %v463 = vunpack.c.l.b16 %v360
    %v464 = vunpack.c.h.b16 %v360
    %v465 = vunpack.c.l.b16 %v361
    %v466 = vunpack.c.h.b16 %v361
    %v467 = vunpack.c.l.b16 %v362
    %v468 = vunpack.c.h.b16 %v362
    %v469 = vunpack.c.l.b16 %v363
    %v470 = vunpack.c.h.b16 %v363
    %v471 = vunpack.c.l.b16 %v364
    %v472 = vunpack.c.h.b16 %v364
    %v473 = vpack.c.b16 %v411, %v409
    %v474 = vpack.c.b16 %v412, %v410
    %v475 = vpack.c.b16 %v415, %v413
    %v476 = vpack.c.b16 %v416, %v414
    %v477 = vpack.c.b16 %v419, %v417
    %v478 = vpack.c.b16 %v420, %v418
    %v479 = vpack.c.b16 %v423, %v421
    %v480 = vpack.c.b16 %v424, %v422
    %v481 = vpack.c.b16 %v427, %v425
    %v482 = vpack.c.b16 %v428, %v426
    %v483 = vpack.c.b16 %v431, %v429
    %v484 = vpack.c.b16 %v432, %v430
    %v485 = vpack.c.b16 %v435, %v433
    %v486 = vpack.c.b16 %v436, %v434
    %v487 = vpack.c.b16 %v439, %v437
    %v488 = vpack.c.b16 %v440, %v438
    %v489 = vpack.c.b16 %v443, %v441
    %v490 = vpack.c.b16 %v444, %v442
    %v491 = vpack.c.b16 %v447, %v445
    %v492 = vpack.c.b16 %v448, %v446
    %v493 = vpack.c.b16 %v451, %v449
    %v494 = vpack.c.b16 %v452, %v450
    %v495 = vpack.c.b16 %v455, %v453
    %v496 = vpack.c.b16 %v456, %v454
    %v497 = vpack.c.b16 %v459, %v457
    %v498 = vpack.c.b16 %v460, %v458
    %v499 = vpack.c.b16 %v463, %v461
    %v500 = vpack.c.b16 %v464, %v462
    %v501 = vpack.c.b16 %v467, %v465
    %v502 = vpack.c.b16 %v468, %v466
    %v503 = vpack.c.b16 %v471, %v469
    %v504 = vpack.c.b16 %v472, %v470
    %537 = vmatprep.subr.bf16.mxu0 %v474
    %538 = vmatpush1.bf16.msra.mxu0 %v473
    %539 = vmatprep.subr.bf16.mxu0 %v476
    %540 = vmatpush1.bf16.msra.mxu0 %v475
    %541 = vmatprep.subr.bf16.mxu0 %v478
    %542 = vmatpush1.bf16.msra.mxu0 %v477
    %543 = vmatprep.subr.bf16.mxu0 %v480
    %544 = vmatpush1.bf16.msra.mxu0 %v479
    %545 = vmatprep.subr.bf16.mxu0 %v482
    %546 = vmatpush1.bf16.msra.mxu0 %v481
    %547 = vmatprep.subr.bf16.mxu0 %v484
    %548 = vmatpush1.bf16.msra.mxu0 %v483
    %549 = vmatprep.subr.bf16.mxu0 %v486
    %550 = vmatpush1.bf16.msra.mxu0 %v485
    %551 = vmatprep.subr.bf16.mxu0 %v488
    %552 = vmatpush1.bf16.msra.mxu0 %v487
    %553 = vmatprep.subr.bf16.mxu0 %v490
    %554 = vmatpush1.bf16.msra.mxu0 %v489
    %555 = vmatprep.subr.bf16.mxu0 %v492
    %556 = vmatpush1.bf16.msra.mxu0 %v491
    %557 = vmatprep.subr.bf16.mxu0 %v494
    %558 = vmatpush1.bf16.msra.mxu0 %v493
    %559 = vmatprep.subr.bf16.mxu0 %v496
    %560 = vmatpush1.bf16.msra.mxu0 %v495
    %561 = vmatprep.subr.bf16.mxu0 %v498
    %562 = vmatpush1.bf16.msra.mxu0 %v497
    %563 = vmatprep.subr.bf16.mxu0 %v500
    %564 = vmatpush1.bf16.msra.mxu0 %v499
    %565 = vmatprep.subr.bf16.mxu0 %v502
    %566 = vmatpush1.bf16.msra.mxu0 %v501
    %567 = vmatprep.subr.bf16.mxu0 %v504
    %568 = vmatpush1.bf16.msra.mxu0 %v503
    %569 = vmatprep.mubr.bf16.mxu0 %v332
    %570 = vmatmul.mubr.bf16.gmra.mrb[0].mxu0 %v331
    %v571 = vpop.f32.mrb[0].mxu0
    %v572 = vadd.f32 %v370, %v571
    %v573 = vpop.f32.mrb[0].mxu0
    %v574 = vadd.f32 %v374, %v573
    %v575 = vpop.f32.mrb[0].mxu0
    %v576 = vadd.f32 %v370, %v575
    %v577 = vpop.f32.mrb[0].mxu0
    %v578 = vadd.f32 %v374, %v577
    %579 = vdwg.mxu0
    %v580 = vmax.f32 %v572, 0.0
    %v581 = vmax.f32 %v574, 0.0
    %v582 = vmax.f32 %v576, 0.0
    %v583 = vmax.f32 %v578, 0.0
    %v584 = vpack.c.bf16 %v582, %v580
    %v585 = vpack.c.bf16 %v583, %v581
    %v586 = vld [vmem:[#allocation6] sm:$0xf]
    %v587 = vld [vmem:[#allocation6 + $0x4] sm:$0xf]
    %v588 = vld [vmem:[#allocation6 + $0x8] sm:$0xf]
    %v589 = vld [vmem:[#allocation6 + $0xc] sm:$0xf]
    %v590 = vld [vmem:[#allocation6 + $0x10] sm:$0xf]
    %v591 = vld [vmem:[#allocation6 + $0x14] sm:$0xf]
    %v592 = vld [vmem:[#allocation6 + $0x18] sm:$0xf]
    %v593 = vld [vmem:[#allocation6 + $0x1c] sm:$0xf]
    %v594 = vld [vmem:[#allocation6 + $0x20] sm:$0xf]
    %v595 = vld [vmem:[#allocation6 + $0x24] sm:$0xf]
    %v596 = vld [vmem:[#allocation6 + $0x28] sm:$0xf]
    %v597 = vld [vmem:[#allocation6 + $0x2c] sm:$0xf]
    %v598 = vld [vmem:[#allocation6 + $0x30] sm:$0xf]
    %v599 = vld [vmem:[#allocation6 + $0x34] sm:$0xf]
    %v600 = vld [vmem:[#allocation6 + $0x38] sm:$0xf]
    %v601 = vld [vmem:[#allocation6 + $0x3c] sm:$0xf]
    %v602 = vld [vmem:[#allocation6 + $0x40] sm:$0xf]
    %v603 = vld [vmem:[#allocation6 + $0x44] sm:$0xf]
    %v604 = vld [vmem:[#allocation6 + $0x48] sm:$0xf]
    %v605 = vld [vmem:[#allocation6 + $0x4c] sm:$0xf]
    %v606 = vld [vmem:[#allocation6 + $0x50] sm:$0xf]
    %v607 = vld [vmem:[#allocation6 + $0x54] sm:$0xf]
    %v608 = vld [vmem:[#allocation6 + $0x58] sm:$0xf]
    %v609 = vld [vmem:[#allocation6 + $0x5c] sm:$0xf]
    %v610 = vld [vmem:[#allocation6 + $0x60] sm:$0xf]
    %v611 = vld [vmem:[#allocation6 + $0x64] sm:$0xf]
    %v612 = vld [vmem:[#allocation6 + $0x68] sm:$0xf]
    %v613 = vld [vmem:[#allocation6 + $0x6c] sm:$0xf]
    %v614 = vld [vmem:[#allocation6 + $0x70] sm:$0xf]
    %v615 = vld [vmem:[#allocation6 + $0x74] sm:$0xf]
    %v616 = vld [vmem:[#allocation6 + $0x78] sm:$0xf]
    %v617 = vld [vmem:[#allocation6 + $0x7c] sm:$0xf]
    %v618 = vld [vmem:[%s6] sm:$0x1]
    %v620 = vlaneseq
    %v621 = vshrl.u32 %v620, 7
    %v622 = vsub.s32 0, %v621
    %v623 = vrot.slane %v618, %v622
    %v657 = vunpack.c.l.b16 %v586
    %v658 = vunpack.c.l.b16 %v587
    %v659 = vunpack.c.l.b16 %v588
    %v660 = vunpack.c.l.b16 %v589
    %v661 = vunpack.c.l.b16 %v590
    %v662 = vunpack.c.l.b16 %v591
    %v663 = vunpack.c.l.b16 %v592
    %v664 = vunpack.c.l.b16 %v593
    %v665 = vunpack.c.l.b16 %v594
    %v666 = vunpack.c.l.b16 %v595
    %v667 = vunpack.c.l.b16 %v596
    %v668 = vunpack.c.l.b16 %v597
    %v669 = vunpack.c.l.b16 %v598
    %v670 = vunpack.c.l.b16 %v599
    %v671 = vunpack.c.l.b16 %v600
    %v672 = vunpack.c.l.b16 %v601
    %v673 = vunpack.c.l.b16 %v602
    %v674 = vunpack.c.l.b16 %v603
    %v675 = vunpack.c.l.b16 %v604
    %v676 = vunpack.c.l.b16 %v605
    %v677 = vunpack.c.l.b16 %v606
    %v678 = vunpack.c.l.b16 %v607
    %v679 = vunpack.c.l.b16 %v608
    %v680 = vunpack.c.l.b16 %v609
    %v681 = vunpack.c.l.b16 %v610
    %v682 = vunpack.c.l.b16 %v611
    %v683 = vunpack.c.l.b16 %v612
    %v684 = vunpack.c.l.b16 %v613
    %v685 = vunpack.c.l.b16 %v614
    %v686 = vunpack.c.l.b16 %v615
    %v687 = vunpack.c.l.b16 %v616
    %v688 = vunpack.c.l.b16 %v617
    %v689 = vpack.c.b16 %v658, %v657
    %v690 = vpack.c.b16 %v660, %v659
    %v691 = vpack.c.b16 %v662, %v661
    %v692 = vpack.c.b16 %v664, %v663
    %v693 = vpack.c.b16 %v666, %v665
    %v694 = vpack.c.b16 %v668, %v667
    %v695 = vpack.c.b16 %v670, %v669
    %v696 = vpack.c.b16 %v672, %v671
    %v697 = vpack.c.b16 %v674, %v673
    %v698 = vpack.c.b16 %v676, %v675
    %v699 = vpack.c.b16 %v678, %v677
    %v700 = vpack.c.b16 %v680, %v679
    %v701 = vpack.c.b16 %v682, %v681
    %v702 = vpack.c.b16 %v684, %v683
    %v703 = vpack.c.b16 %v686, %v685
    %v704 = vpack.c.b16 %v688, %v687
    %721 = vmatprep.subr.bf16.mxu0 0
    %722 = vmatpush1.bf16.msra.mxu0 %v689
    %723 = vmatprep.subr.bf16.mxu0 0
    %724 = vmatpush1.bf16.msra.mxu0 %v690
    %725 = vmatprep.subr.bf16.mxu0 0
    %726 = vmatpush1.bf16.msra.mxu0 %v691
    %727 = vmatprep.subr.bf16.mxu0 0
    %728 = vmatpush1.bf16.msra.mxu0 %v692
    %729 = vmatprep.subr.bf16.mxu0 0
    %730 = vmatpush1.bf16.msra.mxu0 %v693
    %731 = vmatprep.subr.bf16.mxu0 0
    %732 = vmatpush1.bf16.msra.mxu0 %v694
    %733 = vmatprep.subr.bf16.mxu0 0
    %734 = vmatpush1.bf16.msra.mxu0 %v695
    %735 = vmatprep.subr.bf16.mxu0 0
    %736 = vmatpush1.bf16.msra.mxu0 %v696
    %737 = vmatprep.subr.bf16.mxu0 0
    %738 = vmatpush1.bf16.msra.mxu0 %v697
    %739 = vmatprep.subr.bf16.mxu0 0
    %740 = vmatpush1.bf16.msra.mxu0 %v698
    %741 = vmatprep.subr.bf16.mxu0 0
    %742 = vmatpush1.bf16.msra.mxu0 %v699
    %743 = vmatprep.subr.bf16.mxu0 0
    %744 = vmatpush1.bf16.msra.mxu0 %v700
    %745 = vmatprep.subr.bf16.mxu0 0
    %746 = vmatpush1.bf16.msra.mxu0 %v701
    %747 = vmatprep.subr.bf16.mxu0 0
    %748 = vmatpush1.bf16.msra.mxu0 %v702
    %749 = vmatprep.subr.bf16.mxu0 0
    %750 = vmatpush1.bf16.msra.mxu0 %v703
    %751 = vmatprep.subr.bf16.mxu0 0
    %752 = vmatpush1.bf16.msra.mxu0 %v704
    %753 = vmatprep.mubr.bf16.mxu0 %v585
    %754 = vmatmul.mubr.bf16.gmra.mrb[0].mxu0 %v584
    %v755 = vpop.f32.mrb[0].mxu0
    %v756 = vadd.f32 %v623, %v755
    %v757 = vpop.f32.mrb[0].mxu0
    %v758 = vpop.f32.mrb[0].mxu0
    %v759 = vadd.f32 %v623, %v758
    %v760 = vpop.f32.mrb[0].mxu0
    %761 = vdwg.mxu0
    %762 = vst [vmem:[%s7] sm:$0xff] %v756
    %763 = vst [vmem:[%s7 + $0x8] sm:$0xff] %v759
    // Predicated region
    $region42: #{_ffn_forward.1} parent=1 // pred_check
      _
    $region43: #{_ffn_forward.1} parent=1 // pred_check_branch
      %765 = sbr.rel (0) target = $region45
    $region44: #{_ffn_forward.1} parent=1 // pred_region
      _
    $region45: #{_ffn_forward.1} parent=1 // pred_fallthru
      _
    // Predicated region
    $region46: #{_ffn_forward.1} parent=1 // pred_check
      _
    $region47: #{_ffn_forward.1} parent=1 // pred_check_branch
      %767 = sbr.rel (0) target = $region49
    $region48: #{_ffn_forward.1} parent=1 // pred_region
      _
    $region49: #{_ffn_forward.1} parent=1 // pred_fallthru
      _
    %768 = vsyncpa [#allocation3], 1
    %769 = vsyncpa [#allocation5], 1

</llo_original>
